<compile_context>
chip_gen: v5e
topology: v5e:2x2
jax: 0.10.0
libtpu: 0.0.40
codegen_flags: <defaults>
</compile_context>

<pallas_src>
import jax
import jax.numpy as jnp
from jax.experimental import pallas as pl
from jax.experimental.pallas import tpu as pltpu

_HIDDEN = 30
_LANE = 128            # TPU lane width
_SUBLANE = 8           # TPU sublane width (f32)
_MAX_BATCH_TILE = 4096 # big tiles: per-step overhead amortized; tiny VMEM use


def _round_up(x, m):
    return (x + m - 1) // m * m


def _mlp_kernel(xT_ref, w1_ref, b1_ref, w2_ref, b2_ref, o_ref):
    # xT: (D_in, TB)   w1: (H, D_in)   b1: (H, 1)
    # w2: (A_pad, H)   b2: (A_pad, 1)  o : (A_pad, TB)   -- batch on lanes
    h = jnp.dot(w1_ref[...], xT_ref[...], preferred_element_type=jnp.float32)
    h = jnp.maximum(h + b1_ref[...], 0.0)                 # bias + ReLU on VPU
    q = jnp.dot(w2_ref[...], h, preferred_element_type=jnp.float32)
    o_ref[...] = (q + b2_ref[...]).astype(o_ref.dtype)    # lane-dense store


def prepare_params(w1, b1, w2, b2):
    """One-time prep of PyTorch-layout params into kernel-layout constants.

    w1: (H, D_in), b1: (H,), w2: (A, H), b2: (A,)   (nn.Linear layout)
    Returns (w1, b1_col, w2_pad, b2_col_pad) with A padded to 8 sublanes.
    """
    H = w1.shape[0]
    A = w2.shape[0]
    A_pad = _round_up(max(A, _SUBLANE), _SUBLANE)
    w2_p = jnp.zeros((A_pad, H), w2.dtype).at[:A, :].set(w2)
    b2_p = jnp.zeros((A_pad, 1), b2.dtype).at[:A, 0].set(b2)
    b1_col = b1.reshape(H, 1)
    return w1, b1_col, w2_p, b2_p


def network_forward(state, prepared_params, nb_action, *, block_b=_MAX_BATCH_TILE):
    """state: (B, D_in) f32 -> q_values: (B, nb_action) f32."""
    w1, b1_col, w2_p, b2_p = prepared_params
    B, D_in = state.shape
    H = w1.shape[0]
    A_pad = w2_p.shape[0]

    # --- Batch-on-lanes tiling: pad B only to the 128-lane granule. ---------
    B_pad = _round_up(B, _LANE)
    TB = min(block_b, B_pad)
    # Keep >=2 tiles for reasonably large batches so v7x's two TensorCores
    # can split the "parallel" batch axis (negligible cost on 1-TC chips).
    if B_pad >= 4 * _LANE and B_pad // TB < 2:
        TB = _round_up(pl.cdiv(B_pad, 2), _LANE)
    B_pad = _round_up(B_pad, TB)

    # Transposed, lane-dense input (D_in, B_pad); padded columns are zero.
    if B_pad != B:
        x_t = jnp.zeros((D_in, B_pad), state.dtype).at[:, :B].set(state.T)
    else:
        x_t = state.T

    grid = (B_pad // TB,)

    out_t = pl.pallas_call(
        _mlp_kernel,
        out_shape=jax.ShapeDtypeStruct((A_pad, B_pad), jnp.float32),
        grid=grid,
        in_specs=[
            pl.BlockSpec((D_in, TB), lambda i: (0, i)),   # x^T: batch-tiled
            pl.BlockSpec((H, D_in), lambda i: (0, 0)),    # w1: resident
            pl.BlockSpec((H, 1), lambda i: (0, 0)),       # b1: resident
            pl.BlockSpec((A_pad, H), lambda i: (0, 0)),   # w2 (padded): resident
            pl.BlockSpec((A_pad, 1), lambda i: (0, 0)),   # b2 (padded): resident
        ],
        out_specs=pl.BlockSpec((A_pad, TB), lambda i: (0, i)),
        compiler_params=pltpu.CompilerParams(
            dimension_semantics=("parallel",),
        ),
    )(x_t, w1, b1_col, w2_p, b2_p)

    # Strip the (tiny) action / batch padding and return (B, A).
    return out_t[:nb_action, :B].T


def init_params(key, input_size, nb_action, hidden=_HIDDEN):
    """Deterministic init mirroring nn.Linear default init & layout."""
    k1, k2, k3, k4 = jax.random.split(key, 4)
    lim1 = 1.0 / jnp.sqrt(jnp.float32(input_size))
    lim2 = 1.0 / jnp.sqrt(jnp.float32(hidden))
    w1 = jax.random.uniform(k1, (hidden, input_size), jnp.float32, -lim1, lim1)
    b1 = jax.random.uniform(k2, (hidden,), jnp.float32, -lim1, lim1)
    w2 = jax.random.uniform(k3, (nb_action, hidden), jnp.float32, -lim2, lim2)
    b2 = jax.random.uniform(k4, (nb_action,), jnp.float32, -lim2, lim2)
    return w1, b1, w2, b2


def _reference(state, w1, b1, w2, b2):
    return jnp.maximum(state @ w1.T + b1, 0.0) @ w2.T + b2


if __name__ == "__main__":
    key = jax.random.PRNGKey(0)
    input_size = 5     # e.g. state dimension of the self-driving-car env
    nb_action = 3
    batch = 2

    k_params, k_state = jax.random.split(key)
    w1, b1, w2, b2 = init_params(k_params, input_size, nb_action)
    prepared = prepare_params(w1, b1, w2, b2)     # one-time weight prep

    # --- Small-shape correctness run (the DQN inference path). --------------
    state = jax.random.normal(k_state, (batch, input_size), jnp.float32)
    q_values = network_forward(state, prepared, nb_action)
    q_values = jax.block_until_ready(q_values)

    ref = _reference(state, w1, b1, w2, b2)
    assert q_values.shape == (batch, nb_action)
    assert jnp.allclose(q_values, ref, atol=1e-5, rtol=1e-5)

    # --- Batched path (replay-buffer / training): multiple grid steps. ------
    big_b = 2048
    big_state = jax.random.normal(jax.random.PRNGKey(1), (big_b, input_size),
                                  jnp.float32)
    q_big = network_forward(big_state, prepared, nb_action)
    q_big = jax.block_until_ready(q_big)
    ref_big = _reference(big_state, w1, b1, w2, b2)
    assert q_big.shape == (big_b, nb_action)
    assert jnp.allclose(q_big, ref_big, atol=1e-4, rtol=1e-4)

    print("KERNEL_OK")
</pallas_src>

<mosaic_0001>
module attributes {stable_mosaic.version = 11 : i64} {
  func.func @_mlp_kernel(%arg0: i32, %arg1: memref<5x128xf32, #tpu.memory_space<vmem>>, %arg2: memref<30x5xf32, #tpu.memory_space<vmem>>, %arg3: memref<30x1xf32, #tpu.memory_space<vmem>>, %arg4: memref<8x30xf32, #tpu.memory_space<vmem>>, %arg5: memref<8x1xf32, #tpu.memory_space<vmem>>, %arg6: memref<8x128xf32, #tpu.memory_space<vmem>>) attributes {dimension_semantics = [#tpu.dimension_semantics<parallel>], iteration_bounds = array<i64: 1>, scalar_prefetch = 0 : i64, scratch_operands = 0 : i64, tpu.core_type = #tpu.core_type<tc>, window_params = [{transform_indices = @transform_0, window_bounds = array<i64: 5, 128>}, {pipeline_mode = #tpu.pipeline_mode<synchronous>, transform_indices = @transform_1, window_bounds = array<i64: 30, 5>}, {pipeline_mode = #tpu.pipeline_mode<synchronous>, transform_indices = @transform_2, window_bounds = array<i64: 30, 1>}, {pipeline_mode = #tpu.pipeline_mode<synchronous>, transform_indices = @transform_3, window_bounds = array<i64: 8, 30>}, {pipeline_mode = #tpu.pipeline_mode<synchronous>, transform_indices = @transform_4, window_bounds = array<i64: 8, 1>}, {transform_indices = @transform_5, window_bounds = array<i64: 8, 128>}]} {
    %c0 = arith.constant 0 : index
    %c0_0 = arith.constant 0 : index
    %0 = vector.load %arg2[%c0, %c0_0] : memref<30x5xf32, #tpu.memory_space<vmem>>, vector<30x5xf32>
    %c0_1 = arith.constant 0 : index
    %c0_2 = arith.constant 0 : index
    %1 = vector.load %arg1[%c0_1, %c0_2] : memref<5x128xf32, #tpu.memory_space<vmem>>, vector<5x128xf32>
    %cst = arith.constant dense<0.000000e+00> : vector<30x128xf32>
    %2 = tpu.matmul %0, %1, %cst {dimension_numbers = #tpu.dot_dimension_numbers<[1], [0], [0], [1], [0, 0, 1, 1], [], []>} : vector<30x5xf32>, vector<5x128xf32>, vector<30x128xf32> -> vector<30x128xf32>
    %c0_3 = arith.constant 0 : index
    %c0_4 = arith.constant 0 : index
    %3 = vector.load %arg3[%c0_3, %c0_4] : memref<30x1xf32, #tpu.memory_space<vmem>>, vector<30x1xf32>
    %4 = vector.broadcast %3 : vector<30x1xf32> to vector<30x128xf32>
    %5 = arith.addf %2, %4 : vector<30x128xf32>
    %cst_5 = arith.constant 0.000000e+00 : f32
    %6 = vector.broadcast %cst_5 : f32 to vector<30x128xf32>
    %7 = arith.maximumf %5, %6 : vector<30x128xf32>
    %c0_6 = arith.constant 0 : index
    %c0_7 = arith.constant 0 : index
    %8 = vector.load %arg4[%c0_6, %c0_7] : memref<8x30xf32, #tpu.memory_space<vmem>>, vector<8x30xf32>
    %cst_8 = arith.constant dense<0.000000e+00> : vector<8x128xf32>
    %9 = tpu.matmul %8, %7, %cst_8 {dimension_numbers = #tpu.dot_dimension_numbers<[1], [0], [0], [1], [0, 0, 1, 1], [], []>} : vector<8x30xf32>, vector<30x128xf32>, vector<8x128xf32> -> vector<8x128xf32>
    %c0_9 = arith.constant 0 : index
    %c0_10 = arith.constant 0 : index
    %10 = vector.load %arg5[%c0_9, %c0_10] : memref<8x1xf32, #tpu.memory_space<vmem>>, vector<8x1xf32>
    %11 = vector.broadcast %10 : vector<8x1xf32> to vector<8x128xf32>
    %12 = arith.addf %9, %11 : vector<8x128xf32>
    %c0_11 = arith.constant 0 : index
    %c0_12 = arith.constant 0 : index
    %13 = vector.load %arg6[%c0_11, %c0_12] : memref<8x128xf32, #tpu.memory_space<vmem>>, vector<8x128xf32>
    tpu.vector_store %arg6[%c0_11, %c0_12], %12 {strides = array<i32>} : memref<8x128xf32, #tpu.memory_space<vmem>>, vector<8x128xf32>,
    return
  }
  func.func @transform_0(%arg0: i32) -> (i32, i32) {
    %c0_i32 = arith.constant 0 : i32
    %c0_i32_0 = arith.constant 0 : i32
    return %c0_i32, %arg0 : i32, i32
  }
  func.func @transform_1(%arg0: i32) -> (i32, i32) {
    %c0_i32 = arith.constant 0 : i32
    %c0_i32_0 = arith.constant 0 : i32
    %c0_i32_1 = arith.constant 0 : i32
    return %c0_i32, %c0_i32_0 : i32, i32
  }
  func.func @transform_2(%arg0: i32) -> (i32, i32) {
    %c0_i32 = arith.constant 0 : i32
    %c0_i32_0 = arith.constant 0 : i32
    %c0_i32_1 = arith.constant 0 : i32
    return %c0_i32, %c0_i32_0 : i32, i32
  }
  func.func @transform_3(%arg0: i32) -> (i32, i32) {
    %c0_i32 = arith.constant 0 : i32
    %c0_i32_0 = arith.constant 0 : i32
    %c0_i32_1 = arith.constant 0 : i32
    return %c0_i32, %c0_i32_0 : i32, i32
  }
  func.func @transform_4(%arg0: i32) -> (i32, i32) {
    %c0_i32 = arith.constant 0 : i32
    %c0_i32_0 = arith.constant 0 : i32
    %c0_i32_1 = arith.constant 0 : i32
    return %c0_i32, %c0_i32_0 : i32, i32
  }
  func.func @transform_5(%arg0: i32) -> (i32, i32) {
    %c0_i32 = arith.constant 0 : i32
    %c0_i32_0 = arith.constant 0 : i32
    return %c0_i32, %arg0 : i32, i32
  }
}

</mosaic_0001>

<llo_original>
// kernel: tpu_custom_call.1
$region0: #{tpu_custom_call.1}
  #allocation0 [shape = 'u32[]', space=smem, size = 0x4, offset = 0x4, fixed_abs, tag = 'smem constant byte address 0x4 - core index']
  #allocation1 [shape = 'u32[72,128]{1,0:T(1,128)}', space=vmem, size = 0x9000, scoped, tag = 'internal scratch']
  %s0 = inlined_call_operand.vmem [shape: f32[5,128], index: 0, kind: input, shape index: {}]
  %s1 = inlined_call_operand.vmem [shape: f32[30,5], index: 1, kind: input, shape index: {}]
  %s2 = inlined_call_operand.vmem [shape: f32[30,1], index: 2, kind: input, shape index: {}]
  %s3 = inlined_call_operand.vmem [shape: f32[8,30], index: 3, kind: input, shape index: {}]
  %s4 = inlined_call_operand.vmem [shape: f32[8,1], index: 4, kind: input, shape index: {}]
  %s5 = inlined_call_operand.hbm [shape: f32[8,128], index: 5, kind: output, shape index: {}]
  %s6 = sld [smem:[#allocation0]]
  $region30: #{tpu_custom_call.1} parent=0
    _
  %s8 = ssub.s32 1, %s6
  %s9 = scalar_select 0, %s8, %s6
  $region1: #{tpu_custom_call.1} parent=0
    #allocation2 [shape = 'u8[4096]{0}', space=vmem, size = 0x1000, scoped, tag = 'output window, operand 0, single buffered']
    #allocation3 [shape = 's32[1]{0}', space=sflag, size = 0x4, scoped, tag = 'scoped memory for tpu_custom_call.1']
    %10 = vsyncpa [#allocation3], 0
    // Predicated region
    $region2: #{tpu_custom_call.1} parent=1 // pred_check
      _
    $region3: #{tpu_custom_call.1} parent=1 // pred_check_branch
      %12 = sbr.rel (0) target = $region5
    $region4: #{tpu_custom_call.1} parent=1 // pred_region
      _
    $region5: #{tpu_custom_call.1} parent=1 // pred_fallthru
      _
    // Predicated region
    $region6: #{tpu_custom_call.1} parent=1 // pred_check
      _
    $region7: #{tpu_custom_call.1} parent=1 // pred_check_branch
      %14 = sbr.rel (0) target = $region9
    $region8: #{tpu_custom_call.1} parent=1 // pred_region
      _
    $region9: #{tpu_custom_call.1} parent=1 // pred_fallthru
      _
    // Predicated region
    $region10: #{tpu_custom_call.1} parent=1 // pred_check
      _
    $region11: #{tpu_custom_call.1} parent=1 // pred_check_branch
      %16 = sbr.rel (0) target = $region13
    $region12: #{tpu_custom_call.1} parent=1 // pred_region
      _
    $region13: #{tpu_custom_call.1} parent=1 // pred_fallthru
      _
    // Predicated region
    $region14: #{tpu_custom_call.1} parent=1 // pred_check
      _
    $region15: #{tpu_custom_call.1} parent=1 // pred_check_branch
      %18 = sbr.rel (0) target = $region17
    $region16: #{tpu_custom_call.1} parent=1 // pred_region
      _
    $region17: #{tpu_custom_call.1} parent=1 // pred_fallthru
      _
    // Predicated region
    $region18: #{tpu_custom_call.1} parent=1 // pred_check
      _
    $region19: #{tpu_custom_call.1} parent=1 // pred_check_branch
      %20 = sbr.rel (0) target = $region21
    $region20: #{tpu_custom_call.1} parent=1 // pred_region
      _
    $region21: #{tpu_custom_call.1} parent=1 // pred_fallthru
      _
    %v21 = vld [vmem:[%s1] sm:$0xff]
    %v22 = vld [vmem:[%s1 + $0x8] sm:$0xff]
    %v23 = vld [vmem:[%s1 + $0x10] sm:$0xff]
    %v24 = vld [vmem:[%s1 + $0x18] sm:$0x3f]
    %v25 = vld [vmem:[%s0] sm:$0x1f]
    %v26 = vld [vmem:[%s2] sm:$0xff]
    %v27 = vld [vmem:[%s2 + $0x8] sm:$0xff]
    %v28 = vld [vmem:[%s2 + $0x10] sm:$0xff]
    %v29 = vld [vmem:[%s2 + $0x18] sm:$0x3f]
    %31 = vset.pattern.permute.xlu0 0
    %32 = vperm.xlu0 %31, %v26
    %v33 = vpop.permute.xlu0 %32
    %36 = vset.pattern.permute.xlu0 0
    %37 = vperm.xlu0 %36, %v27
    %v38 = vpop.permute.xlu0 %37
    %41 = vset.pattern.permute.xlu0 0
    %42 = vperm.xlu0 %41, %v28
    %v43 = vpop.permute.xlu0 %42
    %46 = vset.pattern.permute.xlu0 0
    %47 = vperm.xlu0 %46, %v29
    %v48 = vpop.permute.xlu0 %47
    %vm50 = vcmask 39936
    %v52 = vsel %vm50, %v21, 0
    %v55 = vsel %vm50, %v22, 0
    %v58 = vsel %vm50, %v23, 0
    %v61 = vsel %vm50, %v24, 0
    %vm63 = vcmask 1044480
    %v65 = vsel %vm63, %v25, 0
    %67 = vmatpush.msra.mxu0 0.0
    %68 = vmatpush.msra.mxu0 0.0
    %69 = vmatpush.msra.mxu0 0.0
    %70 = vmatpush.msra.mxu0 0.0
    %71 = vmatpush.msra.mxu0 0.0
    %72 = vmatpush.msra.mxu0 0.0
    %73 = vmatpush.msra.mxu0 0.0
    %74 = vmatpush.msra.mxu0 0.0
    %75 = vmatpush.msra.mxu0 0.0
    %76 = vmatpush.msra.mxu0 0.0
    %77 = vmatpush.msra.mxu0 0.0
    %78 = vmatpush.msra.mxu0 0.0
    %79 = vmatpush.msra.mxu0 0.0
    %80 = vmatpush.msra.mxu0 0.0
    %81 = vmatpush.msra.mxu0 0.0
    %82 = vmatpush.msra.mxu0 %v65
    %83 = vmatmul.f32.gmra.mxu0 %v52
    %v84 = vpop.f32.mrf.mxu0
    %v85 = vadd.f32 %v33, %v84
    %86 = vmatmul.f32.gmra.mxu0 %v55
    %v87 = vpop.f32.mrf.mxu0
    %v88 = vadd.f32 %v38, %v87
    %89 = vmatmul.f32.gmra.mxu0 %v58
    %v90 = vpop.f32.mrf.mxu0
    %v91 = vadd.f32 %v43, %v90
    %92 = vmatmul.f32.gmra.mxu0 %v61
    %v93 = vpop.f32.mrf.mxu0
    %v94 = vadd.f32 %v48, %v93
    %95 = vdwg.mxu0
    %v96 = vmax.f32 %v85, 0.0
    %v97 = vmax.f32 %v88, 0.0
    %v98 = vmax.f32 %v91, 0.0
    %v99 = vmax.f32 %v94, 0.0
    %v100 = vld [vmem:[%s3] sm:$0xff]
    %v101 = vld [vmem:[%s4] sm:$0xff]
    %103 = vset.pattern.permute.xlu0 0
    %104 = vperm.xlu0 %103, %v101
    %v105 = vpop.permute.xlu0 %104
    %vm107 = vcmask 244736
    %v109 = vsel %vm107, %v100, 0
    %vm111 = vcmask 1045504
    %v113 = vsel %vm111, %v99, 0
    %115 = vmatpush.msra.mxu0 0.0
    %116 = vmatpush.msra.mxu0 0.0
    %117 = vmatpush.msra.mxu0 0.0
    %118 = vmatpush.msra.mxu0 0.0
    %119 = vmatpush.msra.mxu0 0.0
    %120 = vmatpush.msra.mxu0 0.0
    %121 = vmatpush.msra.mxu0 0.0
    %122 = vmatpush.msra.mxu0 0.0
    %123 = vmatpush.msra.mxu0 0.0
    %124 = vmatpush.msra.mxu0 0.0
    %125 = vmatpush.msra.mxu0 0.0
    %126 = vmatpush.msra.mxu0 0.0
    %127 = vmatpush.msra.mxu0 %v113
    %128 = vmatpush.msra.mxu0 %v98
    %129 = vmatpush.msra.mxu0 %v97
    %130 = vmatpush.msra.mxu0 %v96
    %131 = vmatmul.f32.gmra.mxu0 %v109
    %v132 = vpop.f32.mrf.mxu0
    %v133 = vadd.f32 %v105, %v132
    %134 = vdwg.mxu0
    %135 = vst [vmem:[#allocation2] sm:$0xff] %v133
    // Predicated region
    $region22: #{tpu_custom_call.1} parent=1 // pred_check
      _
    $region23: #{tpu_custom_call.1} parent=1 // pred_check_branch
      %137 = sbr.rel (0) target = $region25
    $region24: #{tpu_custom_call.1} parent=1 // pred_region
      %139 = vsyncadd [#allocation3], 0
      %s141 = sshll.u32 [#allocation2], 4
      %s142 = int_to_ptr.vmem [resolvable:$true] %s141
      %s143 = sshll.u32 %s5, 4
      %s144 = int_to_ptr.hbm [resolvable:$true] %s143
      %146 = dma.vmem_to_hbm [thread:$0]  %s142, 128, %s144, [#allocation3]
    $region25: #{tpu_custom_call.1} parent=1 // pred_fallthru
      _
    // Predicated region
    $region26: #{tpu_custom_call.1} parent=1 // pred_check
      _
    $region27: #{tpu_custom_call.1} parent=1 // pred_check_branch
      %148 = sbr.rel (0) target = $region29
    $region28: #{tpu_custom_call.1} parent=1 // pred_region
      %150 = dma.done [#allocation3], 128
    $region29: #{tpu_custom_call.1} parent=1 // pred_fallthru
      _
    %151 = vsyncpa [#allocation3], 1

</llo_original>
